<compile_context>
chip_gen: v7x
topology: tpu7x:2x2x1
jax: 0.10.0
libtpu: 0.0.40
codegen_flags: <defaults>
</compile_context>

<pallas_src>
import functools

import jax
import jax.numpy as jnp
from jax.experimental import pallas as pl
from jax.experimental.pallas import tpu as pltpu


def ffn_kernel(x_ref, w1_ref, b1_ref, w2_ref, b2_ref, g_ref, beta_ref,
               o_ref, acc_ref, *, eps: float):
    k = pl.program_id(1)

    @pl.when(k == 0)
    def _init():
        # Fold the linear2 bias into the accumulator init.
        acc_ref[...] = jnp.broadcast_to(b2_ref[...], acc_ref.shape)

    x = x_ref[...]  # [tm, H], native dtype (feeds the MXU directly)

    # linear1 slice + ReLU: x @ W1[:, k-tile]  (f32 accumulation on the MXU)
    h = jnp.dot(x, w1_ref[...], preferred_element_type=jnp.float32)
    h = jnp.maximum(h + b1_ref[...], 0.0)

    # partial linear2: accumulate h @ W2[k-tile, :] over the reduction axis
    acc_ref[...] += jnp.dot(h.astype(w2_ref.dtype), w2_ref[...],
                            preferred_element_type=jnp.float32)

    @pl.when(k == pl.num_programs(1) - 1)
    def _finalize():
        # dropout is eval/inference-mode identity.
        # TODO(synk): training-mode dropout would need pltpu.prng_seed +
        #             pltpu.prng_random_bits masking.
        z = acc_ref[...] + x.astype(jnp.float32)          # residual
        mean = jnp.mean(z, axis=-1, keepdims=True)
        var = jnp.mean(jnp.square(z - mean), axis=-1, keepdims=True)
        zn = (z - mean) * jax.lax.rsqrt(var + eps)
        o_ref[...] = (zn * g_ref[...] + beta_ref[...]).astype(o_ref.dtype)


def _round_up(a, b):
    return ((a + b - 1) // b) * b


def feed_forward(x, w1, b1, w2, b2, gamma, beta, *, eps=1e-5,
                 tm=256, tk=512, vmem_limit_bytes=64 * 1024 * 1024):
    """x: [bs, seq, hidden] -> [bs, seq, hidden].

    Tunables (sweep per generation):
      tm: row tile.  v5e: 128-256, v6e/v7x: 256-512.
      tk: intermediate (reduction) tile, multiple of 128 (256+ on v6e/v7x).
    """
    bs, seq, hidden = x.shape
    inter = w1.shape[1]
    M = bs * seq

    # Clamp tiles to (8, 128)-friendly sizes when the problem is small.
    tm = min(tm, _round_up(M, 8))
    tk = min(tk, _round_up(inter, 128))
    M_pad = _round_up(M, tm)
    inter_pad = _round_up(inter, tk)

    x2d = x.reshape(M, hidden)
    if M_pad != M:
        x2d = jnp.pad(x2d, ((0, M_pad - M), (0, 0)))
    if inter_pad != inter:
        # zero-pad along the intermediate dim is exact: relu(x@0 + 0) @ 0 == 0
        w1 = jnp.pad(w1, ((0, 0), (0, inter_pad - inter)))
        b1 = jnp.pad(b1, ((0, inter_pad - inter),))
        w2 = jnp.pad(w2, ((0, inter_pad - inter), (0, 0)))

    # Per-feature vectors kept 2-D (f32) so they broadcast cleanly in-kernel.
    b1_2d = b1.reshape(1, inter_pad).astype(jnp.float32)
    b2_2d = b2.reshape(1, hidden).astype(jnp.float32)
    g_2d = gamma.reshape(1, hidden).astype(jnp.float32)
    beta_2d = beta.reshape(1, hidden).astype(jnp.float32)

    grid = (M_pad // tm, inter_pad // tk)

    out = pl.pallas_call(
        functools.partial(ffn_kernel, eps=eps),
        out_shape=jax.ShapeDtypeStruct((M_pad, hidden), x.dtype),
        grid_spec=pltpu.PrefetchScalarGridSpec(
            num_scalar_prefetch=0,
            grid=grid,
            in_specs=[
                pl.BlockSpec((tm, hidden), lambda i, k: (i, 0)),   # x rows
                pl.BlockSpec((hidden, tk), lambda i, k: (0, k)),   # W1[:, k]
                pl.BlockSpec((1, tk), lambda i, k: (0, k)),        # b1[k]
                pl.BlockSpec((tk, hidden), lambda i, k: (k, 0)),   # W2[k, :]
                pl.BlockSpec((1, hidden), lambda i, k: (0, 0)),    # b2
                pl.BlockSpec((1, hidden), lambda i, k: (0, 0)),    # gamma
                pl.BlockSpec((1, hidden), lambda i, k: (0, 0)),    # beta
            ],
            out_specs=pl.BlockSpec((tm, hidden), lambda i, k: (i, 0)),
            scratch_shapes=[pltpu.VMEM((tm, hidden), jnp.float32)],
        ),
        compiler_params=pltpu.CompilerParams(
            dimension_semantics=("parallel", "arbitrary"),
            vmem_limit_bytes=vmem_limit_bytes,
        ),
    )(x2d, w1, b1_2d, w2, b2_2d, g_2d, beta_2d)

    return out[:M].reshape(bs, seq, hidden)


def init_params(key, hidden_size, intermediate_size, dtype=jnp.float32):
    """Deterministic PyTorch-style init: U(-1/sqrt(fan_in), 1/sqrt(fan_in))."""
    k1, k2, k3, k4 = jax.random.split(key, 4)
    bound1 = 1.0 / jnp.sqrt(hidden_size)
    bound2 = 1.0 / jnp.sqrt(intermediate_size)
    # stored as [in, out] so kernel does x @ W (== PyTorch x @ W.T)
    w1 = jax.random.uniform(k1, (hidden_size, intermediate_size),
                            dtype, -bound1, bound1)
    b1 = jax.random.uniform(k2, (intermediate_size,), dtype, -bound1, bound1)
    w2 = jax.random.uniform(k3, (intermediate_size, hidden_size),
                            dtype, -bound2, bound2)
    b2 = jax.random.uniform(k4, (hidden_size,), dtype, -bound2, bound2)
    gamma = jnp.ones((hidden_size,), dtype)
    beta = jnp.zeros((hidden_size,), dtype)
    return w1, b1, w2, b2, gamma, beta


def feed_forward_ref(x, w1, b1, w2, b2, gamma, beta, eps=1e-5):
    """Pure-JAX reference (eval-mode dropout)."""
    h = jnp.maximum(x @ w1 + b1, 0.0)
    y = h @ w2 + b2
    z = y + x
    mean = jnp.mean(z, axis=-1, keepdims=True)
    var = jnp.mean(jnp.square(z - mean), axis=-1, keepdims=True)
    return (z - mean) * jax.lax.rsqrt(var + eps) * gamma + beta


if __name__ == "__main__":
    bs, seq, hidden, inter = 2, 8, 32, 64
    key = jax.random.PRNGKey(0)
    kx, kp = jax.random.split(key)
    x = jax.random.normal(kx, (bs, seq, hidden), jnp.float32)
    params = init_params(kp, hidden, inter)

    out = feed_forward(x, *params)
    out = jax.block_until_ready(out)

    ref = feed_forward_ref(x, *params)
    assert out.shape == (bs, seq, hidden)
    assert jnp.allclose(out, ref, atol=1e-4, rtol=1e-4), "mismatch vs reference"
    print("KERNEL_OK")
</pallas_src>

<mosaic_0001>
module attributes {stable_mosaic.version = 11 : i64} {
  func.func @ffn_kernel(%arg0: i32, %arg1: i32, %arg2: memref<16x32xf32, #tpu.memory_space<vmem>>, %arg3: memref<32x128xf32, #tpu.memory_space<vmem>>, %arg4: memref<1x128xf32, #tpu.memory_space<vmem>>, %arg5: memref<128x32xf32, #tpu.memory_space<vmem>>, %arg6: memref<1x32xf32, #tpu.memory_space<vmem>>, %arg7: memref<1x32xf32, #tpu.memory_space<vmem>>, %arg8: memref<1x32xf32, #tpu.memory_space<vmem>>, %arg9: memref<16x32xf32, #tpu.memory_space<vmem>>, %arg10: memref<16x32xf32, #tpu.memory_space<vmem>>) attributes {dimension_semantics = [#tpu.dimension_semantics<parallel>, #tpu.dimension_semantics<arbitrary>], iteration_bounds = array<i64: 1, 1>, scalar_prefetch = 0 : i64, scratch_operands = 1 : i64, tpu.core_type = #tpu.core_type<tc>, window_params = [{transform_indices = @transform_0, window_bounds = array<i64: 16, 32>}, {transform_indices = @transform_1, window_bounds = array<i64: 32, 128>}, {transform_indices = @transform_2, window_bounds = array<i64: 1, 128>}, {transform_indices = @transform_3, window_bounds = array<i64: 128, 32>}, {pipeline_mode = #tpu.pipeline_mode<synchronous>, transform_indices = @transform_4, window_bounds = array<i64: 1, 32>}, {pipeline_mode = #tpu.pipeline_mode<synchronous>, transform_indices = @transform_5, window_bounds = array<i64: 1, 32>}, {pipeline_mode = #tpu.pipeline_mode<synchronous>, transform_indices = @transform_6, window_bounds = array<i64: 1, 32>}, {transform_indices = @transform_7, window_bounds = array<i64: 16, 32>}]} {
    %c0_i32 = arith.constant 0 : i32
    %0 = arith.cmpi eq, %arg1, %c0_i32 : i32
    %1 = arith.extui %0 : i1 to i32
    %c0_i32_0 = arith.constant 0 : i32
    %2 = arith.cmpi ne, %1, %c0_i32_0 : i32
    scf.if %2 {
      %c0_16 = arith.constant 0 : index
      %c0_17 = arith.constant 0 : index
      %19 = vector.load %arg6[%c0_16, %c0_17] : memref<1x32xf32, #tpu.memory_space<vmem>>, vector<1x32xf32>
      %20 = vector.shape_cast %19 : vector<1x32xf32> to vector<1x32xf32>
      %21 = vector.broadcast %20 : vector<1x32xf32> to vector<16x32xf32>
      %c0_18 = arith.constant 0 : index
      %c0_19 = arith.constant 0 : index
      %22 = vector.load %arg10[%c0_18, %c0_19] : memref<16x32xf32, #tpu.memory_space<vmem>>, vector<16x32xf32>
      tpu.vector_store %arg10[%c0_18, %c0_19], %21 {strides = array<i32>} : memref<16x32xf32, #tpu.memory_space<vmem>>, vector<16x32xf32>,
    } else {
    }
    %c0 = arith.constant 0 : index
    %c0_1 = arith.constant 0 : index
    %3 = vector.load %arg2[%c0, %c0_1] : memref<16x32xf32, #tpu.memory_space<vmem>>, vector<16x32xf32>
    %c0_2 = arith.constant 0 : index
    %c0_3 = arith.constant 0 : index
    %4 = vector.load %arg3[%c0_2, %c0_3] : memref<32x128xf32, #tpu.memory_space<vmem>>, vector<32x128xf32>
    %cst = arith.constant dense<0.000000e+00> : vector<16x128xf32>
    %5 = tpu.matmul %3, %4, %cst {dimension_numbers = #tpu.dot_dimension_numbers<[1], [0], [0], [1], [0, 0, 1, 1], [], []>} : vector<16x32xf32>, vector<32x128xf32>, vector<16x128xf32> -> vector<16x128xf32>
    %c0_4 = arith.constant 0 : index
    %c0_5 = arith.constant 0 : index
    %6 = vector.load %arg4[%c0_4, %c0_5] : memref<1x128xf32, #tpu.memory_space<vmem>>, vector<1x128xf32>
    %7 = vector.broadcast %6 : vector<1x128xf32> to vector<16x128xf32>
    %8 = arith.addf %5, %7 : vector<16x128xf32>
    %cst_6 = arith.constant 0.000000e+00 : f32
    %9 = vector.broadcast %cst_6 : f32 to vector<16x128xf32>
    %10 = arith.maximumf %8, %9 : vector<16x128xf32>
    %c0_7 = arith.constant 0 : index
    %c0_8 = arith.constant 0 : index
    %11 = vector.load %arg10[%c0_7, %c0_8] : memref<16x32xf32, #tpu.memory_space<vmem>>, vector<16x32xf32>
    %c0_9 = arith.constant 0 : index
    %c0_10 = arith.constant 0 : index
    %12 = vector.load %arg5[%c0_9, %c0_10] : memref<128x32xf32, #tpu.memory_space<vmem>>, vector<128x32xf32>
    %cst_11 = arith.constant dense<0.000000e+00> : vector<16x32xf32>
    %13 = tpu.matmul %10, %12, %cst_11 {dimension_numbers = #tpu.dot_dimension_numbers<[1], [0], [0], [1], [0, 0, 1, 1], [], []>} : vector<16x128xf32>, vector<128x32xf32>, vector<16x32xf32> -> vector<16x32xf32>
    %14 = arith.addf %11, %13 : vector<16x32xf32>
    %c0_12 = arith.constant 0 : index
    %c0_13 = arith.constant 0 : index
    %15 = vector.load %arg10[%c0_12, %c0_13] : memref<16x32xf32, #tpu.memory_space<vmem>>, vector<16x32xf32>
    tpu.vector_store %arg10[%c0_12, %c0_13], %14 {strides = array<i32>} : memref<16x32xf32, #tpu.memory_space<vmem>>, vector<16x32xf32>,
    %c0_i32_14 = arith.constant 0 : i32
    %16 = arith.cmpi eq, %arg1, %c0_i32_14 : i32
    %17 = arith.extui %16 : i1 to i32
    %c0_i32_15 = arith.constant 0 : i32
    %18 = arith.cmpi ne, %17, %c0_i32_15 : i32
    scf.if %18 {
      %c0_16 = arith.constant 0 : index
      %c0_17 = arith.constant 0 : index
      %19 = vector.load %arg10[%c0_16, %c0_17] : memref<16x32xf32, #tpu.memory_space<vmem>>, vector<16x32xf32>
      %20 = arith.addf %19, %3 : vector<16x32xf32>
      %cst_18 = arith.constant dense<0.000000e+00> : vector<16xf32>
      %21 = vector.multi_reduction <add>, %20, %cst_18 [1] : vector<16x32xf32> to vector<16xf32>
      %22 = vector.shape_cast %21 : vector<16xf32> to vector<16x1xf32>
      %cst_19 = arith.constant 3.200000e+01 : f32
      %23 = vector.broadcast %cst_19 : f32 to vector<16x1xf32>
      %24 = arith.divf %22, %23 : vector<16x1xf32>
      %25 = vector.broadcast %24 : vector<16x1xf32> to vector<16x32xf32>
      %26 = arith.subf %20, %25 : vector<16x32xf32>
      %27 = arith.mulf %26, %26 : vector<16x32xf32>
      %cst_20 = arith.constant dense<0.000000e+00> : vector<16xf32>
      %28 = vector.multi_reduction <add>, %27, %cst_20 [1] : vector<16x32xf32> to vector<16xf32>
      %29 = vector.shape_cast %28 : vector<16xf32> to vector<16x1xf32>
      %cst_21 = arith.constant 3.200000e+01 : f32
      %30 = vector.broadcast %cst_21 : f32 to vector<16x1xf32>
      %31 = arith.divf %29, %30 : vector<16x1xf32>
      %32 = vector.broadcast %24 : vector<16x1xf32> to vector<16x32xf32>
      %33 = arith.subf %20, %32 : vector<16x32xf32>
      %cst_22 = arith.constant 9.99999974E-6 : f32
      %34 = vector.broadcast %cst_22 : f32 to vector<16x1xf32>
      %35 = arith.addf %31, %34 : vector<16x1xf32>
      %36 = math.rsqrt %35 : vector<16x1xf32>
      %37 = vector.broadcast %36 : vector<16x1xf32> to vector<16x32xf32>
      %38 = arith.mulf %33, %37 : vector<16x32xf32>
      %c0_23 = arith.constant 0 : index
      %c0_24 = arith.constant 0 : index
      %39 = vector.load %arg7[%c0_23, %c0_24] : memref<1x32xf32, #tpu.memory_space<vmem>>, vector<1x32xf32>
      %40 = vector.broadcast %39 : vector<1x32xf32> to vector<16x32xf32>
      %41 = arith.mulf %38, %40 : vector<16x32xf32>
      %c0_25 = arith.constant 0 : index
      %c0_26 = arith.constant 0 : index
      %42 = vector.load %arg8[%c0_25, %c0_26] : memref<1x32xf32, #tpu.memory_space<vmem>>, vector<1x32xf32>
      %43 = vector.broadcast %42 : vector<1x32xf32> to vector<16x32xf32>
      %44 = arith.addf %41, %43 : vector<16x32xf32>
      %c0_27 = arith.constant 0 : index
      %c0_28 = arith.constant 0 : index
      %45 = vector.load %arg9[%c0_27, %c0_28] : memref<16x32xf32, #tpu.memory_space<vmem>>, vector<16x32xf32>
      tpu.vector_store %arg9[%c0_27, %c0_28], %44 {strides = array<i32>} : memref<16x32xf32, #tpu.memory_space<vmem>>, vector<16x32xf32>,
    } else {
    }
    return
  }
  func.func @transform_0(%arg0: i32, %arg1: i32) -> (i32, i32) {
    %c0_i32 = arith.constant 0 : i32
    %c0_i32_0 = arith.constant 0 : i32
    return %arg0, %c0_i32 : i32, i32
  }
  func.func @transform_1(%arg0: i32, %arg1: i32) -> (i32, i32) {
    %c0_i32 = arith.constant 0 : i32
    %c0_i32_0 = arith.constant 0 : i32
    return %c0_i32, %arg1 : i32, i32
  }
  func.func @transform_2(%arg0: i32, %arg1: i32) -> (i32, i32) {
    %c0_i32 = arith.constant 0 : i32
    %c0_i32_0 = arith.constant 0 : i32
    return %c0_i32, %arg1 : i32, i32
  }
  func.func @transform_3(%arg0: i32, %arg1: i32) -> (i32, i32) {
    %c0_i32 = arith.constant 0 : i32
    %c0_i32_0 = arith.constant 0 : i32
    return %arg1, %c0_i32 : i32, i32
  }
  func.func @transform_4(%arg0: i32, %arg1: i32) -> (i32, i32) {
    %c0_i32 = arith.constant 0 : i32
    %c0_i32_0 = arith.constant 0 : i32
    %c0_i32_1 = arith.constant 0 : i32
    return %c0_i32, %c0_i32_0 : i32, i32
  }
  func.func @transform_5(%arg0: i32, %arg1: i32) -> (i32, i32) {
    %c0_i32 = arith.constant 0 : i32
    %c0_i32_0 = arith.constant 0 : i32
    %c0_i32_1 = arith.constant 0 : i32
    return %c0_i32, %c0_i32_0 : i32, i32
  }
  func.func @transform_6(%arg0: i32, %arg1: i32) -> (i32, i32) {
    %c0_i32 = arith.constant 0 : i32
    %c0_i32_0 = arith.constant 0 : i32
    %c0_i32_1 = arith.constant 0 : i32
    return %c0_i32, %c0_i32_0 : i32, i32
  }
  func.func @transform_7(%arg0: i32, %arg1: i32) -> (i32, i32) {
    %c0_i32 = arith.constant 0 : i32
    %c0_i32_0 = arith.constant 0 : i32
    return %arg0, %c0_i32 : i32, i32
  }
}

</mosaic_0001>

<llo_original>
// kernel: tpu_custom_call.1
$region0: #{tpu_custom_call.1}
  #allocation0 [shape = 'u32[]', space=smem, size = 0x4, offset = 0x4, fixed_abs, tag = 'smem constant byte address 0x4 - core index']
  #allocation1 [shape = 'u32[144,128]{1,0:T(1,128)}', space=vmem, size = 0x12000, scoped, tag = 'internal scratch']
  #allocation2 [shape = 'f32[16,32]{1,0:T(8,128)}', space=vmem, size = 0x2000, scoped, tag = 'scratch operand']
  %s0 = inlined_call_operand.hbm [shape: f32[16,32], index: 0, kind: input, shape index: {}]
  %s1 = inlined_call_operand.hbm [shape: f32[32,128], index: 1, kind: input, shape index: {}]
  %s2 = inlined_call_operand.hbm [shape: f32[1,128], index: 2, kind: input, shape index: {}]
  %s3 = inlined_call_operand.hbm [shape: f32[128,32], index: 3, kind: input, shape index: {}]
  %s4 = inlined_call_operand.hbm [shape: f32[1,32], index: 4, kind: input, shape index: {}]
  %s5 = inlined_call_operand.hbm [shape: f32[1,32], index: 5, kind: input, shape index: {}]
  %s6 = inlined_call_operand.hbm [shape: f32[1,32], index: 6, kind: input, shape index: {}]
  %s7 = inlined_call_operand.hbm [shape: f32[16,32], index: 7, kind: output, shape index: {}]
  %s8 = sld [smem:[#allocation0]]
  $region74: #{tpu_custom_call.1} parent=0
    _
  %s10 = ssub.s32 1, %s8
  %s11 = scalar_select 0, %s10, %s8
  $region1: #{tpu_custom_call.1} parent=0
    #allocation3 [shape = 'u8[8192]{0}', space=vmem, size = 0x2000, scoped, tag = 'input window, operand 0, single buffered']
    #allocation4 [shape = 's32[1]{0}', space=sflag, size = 0x4, scoped, tag = 'scoped memory for tpu_custom_call.1']
    #allocation5 [shape = 's32[1]{0}', space=sflag, size = 0x4, scoped, tag = 'scoped memory for tpu_custom_call.1']
    #allocation6 [shape = 'u8[16384]{0}', space=vmem, size = 0x4000, scoped, tag = 'input window, operand 1, single buffered']
    #allocation7 [shape = 's32[1]{0}', space=sflag, size = 0x4, scoped, tag = 'scoped memory for tpu_custom_call.1']
    #allocation8 [shape = 'u8[512]{0}', space=vmem, size = 0x400, scoped, tag = 'input window, operand 2, single buffered']
    #allocation9 [shape = 'u8[65536]{0}', space=vmem, size = 0x10000, scoped, tag = 'input window, operand 3, single buffered']
    #allocation10 [shape = 's32[1]{0}', space=sflag, size = 0x4, scoped, tag = 'scoped memory for tpu_custom_call.1']
    #allocation11 [shape = 'u8[512]{0}', space=vmem, size = 0x400, scoped, tag = 'input window, operand 4, single buffered']
    #allocation12 [shape = 'u8[512]{0}', space=vmem, size = 0x400, scoped, tag = 'input window, operand 5, single buffered']
    #allocation13 [shape = 's32[1]{0}', space=sflag, size = 0x4, scoped, tag = 'scoped memory for tpu_custom_call.1']
    #allocation14 [shape = 'u8[512]{0}', space=vmem, size = 0x400, scoped, tag = 'input window, operand 6, single buffered']
    #allocation15 [shape = 'u8[8192]{0}', space=vmem, size = 0x2000, scoped, tag = 'output window, operand 0, single buffered']
    %12 = vsyncpa [#allocation4], 0
    %13 = vsyncpa [#allocation7], 0
    %14 = vsyncpa [#allocation10], 0
    %15 = vsyncpa [#allocation13], 0
    %16 = vsyncpa [#allocation5], 0
    // Predicated region
    $region2: #{tpu_custom_call.1} parent=1 // pred_check
      _
    $region3: #{tpu_custom_call.1} parent=1 // pred_check_branch
      %18 = sbr.rel (0) target = $region5
    $region4: #{tpu_custom_call.1} parent=1 // pred_region
      %s20 = ssub.s32 256, 256
      %21 = vsyncadd [#allocation4], %s20
      %s22 = sshll.u32 [#allocation3], 4
      %s23 = int_to_ptr.vmem [resolvable:$true] %s22
      %28 = dma.hbm_to_vmem [thread:$0]  %s0, 256, %s23, [#allocation4], 128, 128, 8
    $region5: #{tpu_custom_call.1} parent=1 // pred_fallthru
      _
    // Predicated region
    $region6: #{tpu_custom_call.1} parent=1 // pred_check
      _
    $region7: #{tpu_custom_call.1} parent=1 // pred_check_branch
      %30 = sbr.rel (0) target = $region9
    $region8: #{tpu_custom_call.1} parent=1 // pred_region
      %s32 = ssub.s32 512, 512
      %33 = vsyncadd [#allocation7], %s32
      %s34 = sshll.u32 [#allocation6], 4
      %s35 = int_to_ptr.vmem [resolvable:$true] %s34
      %40 = dma.hbm_to_vmem [thread:$0]  %s1, 512, %s35, [#allocation7], 128, 128, 8
    $region9: #{tpu_custom_call.1} parent=1 // pred_fallthru
      _
    // Predicated region
    $region10: #{tpu_custom_call.1} parent=1 // pred_check
      _
    $region11: #{tpu_custom_call.1} parent=1 // pred_check_branch
      %42 = sbr.rel (0) target = $region13
    $region12: #{tpu_custom_call.1} parent=1 // pred_region
      %s44 = ssub.s32 16, 16
      %45 = vsyncadd [#allocation7], %s44
      %s47 = sshll.u32 [#allocation8], 4
      %s48 = int_to_ptr.vmem [resolvable:$true] %s47
      %50 = dma.hbm_to_vmem [thread:$0]  %s2, 16, %s48, [#allocation7]
    $region13: #{tpu_custom_call.1} parent=1 // pred_fallthru
      _
    // Predicated region
    $region14: #{tpu_custom_call.1} parent=1 // pred_check
      _
    $region15: #{tpu_custom_call.1} parent=1 // pred_check_branch
      %52 = sbr.rel (0) target = $region17
    $region16: #{tpu_custom_call.1} parent=1 // pred_region
      %s54 = ssub.s32 2048, 2048
      %55 = vsyncadd [#allocation10], %s54
      %s56 = sshll.u32 [#allocation9], 4
      %s57 = int_to_ptr.vmem [resolvable:$true] %s56
      %62 = dma.hbm_to_vmem [thread:$0]  %s3, 2048, %s57, [#allocation10], 128, 128, 8
    $region17: #{tpu_custom_call.1} parent=1 // pred_fallthru
      _
    // Predicated region
    $region18: #{tpu_custom_call.1} parent=1 // pred_check
      _
    $region19: #{tpu_custom_call.1} parent=1 // pred_check_branch
      %64 = sbr.rel (0) target = $region21
    $region20: #{tpu_custom_call.1} parent=1 // pred_region
      %s66 = ssub.s32 16, 16
      %67 = vsyncadd [#allocation10], %s66
      %s69 = sshll.u32 [#allocation11], 4
      %s70 = int_to_ptr.vmem [resolvable:$true] %s69
      %72 = dma.hbm_to_vmem [thread:$0]  %s4, 16, %s70, [#allocation10]
    $region21: #{tpu_custom_call.1} parent=1 // pred_fallthru
      _
    // Predicated region
    $region22: #{tpu_custom_call.1} parent=1 // pred_check
      _
    $region23: #{tpu_custom_call.1} parent=1 // pred_check_branch
      %74 = sbr.rel (0) target = $region25
    $region24: #{tpu_custom_call.1} parent=1 // pred_region
      %s76 = ssub.s32 16, 16
      %77 = vsyncadd [#allocation13], %s76
      %s79 = sshll.u32 [#allocation12], 4
      %s80 = int_to_ptr.vmem [resolvable:$true] %s79
      %82 = dma.hbm_to_vmem [thread:$0]  %s5, 16, %s80, [#allocation13]
    $region25: #{tpu_custom_call.1} parent=1 // pred_fallthru
      _
    // Predicated region
    $region26: #{tpu_custom_call.1} parent=1 // pred_check
      _
    $region27: #{tpu_custom_call.1} parent=1 // pred_check_branch
      %84 = sbr.rel (0) target = $region29
    $region28: #{tpu_custom_call.1} parent=1 // pred_region
      %s86 = ssub.s32 16, 16
      %87 = vsyncadd [#allocation13], %s86
      %s89 = sshll.u32 [#allocation14], 4
      %s90 = int_to_ptr.vmem [resolvable:$true] %s89
      %92 = dma.hbm_to_vmem [thread:$0]  %s6, 16, %s90, [#allocation13]
    $region29: #{tpu_custom_call.1} parent=1 // pred_fallthru
      _
    // Predicated region
    $region30: #{tpu_custom_call.1} parent=1 // pred_check
      _
    $region31: #{tpu_custom_call.1} parent=1 // pred_check_branch
      %94 = sbr.rel (0) target = $region33
    $region32: #{tpu_custom_call.1} parent=1 // pred_region
      %95 = dma.done [#allocation4], 256
    $region33: #{tpu_custom_call.1} parent=1 // pred_fallthru
      _
    // Predicated region
    $region34: #{tpu_custom_call.1} parent=1 // pred_check
      _
    $region35: #{tpu_custom_call.1} parent=1 // pred_check_branch
      %97 = sbr.rel (0) target = $region37
    $region36: #{tpu_custom_call.1} parent=1 // pred_region
      %98 = dma.done [#allocation7], 512
    $region37: #{tpu_custom_call.1} parent=1 // pred_fallthru
      _
    // Predicated region
    $region38: #{tpu_custom_call.1} parent=1 // pred_check
      _
    $region39: #{tpu_custom_call.1} parent=1 // pred_check_branch
      %100 = sbr.rel (0) target = $region41
    $region40: #{tpu_custom_call.1} parent=1 // pred_region
      %101 = dma.done [#allocation7], 16
    $region41: #{tpu_custom_call.1} parent=1 // pred_fallthru
      _
    // Predicated region
    $region42: #{tpu_custom_call.1} parent=1 // pred_check
      _
    $region43: #{tpu_custom_call.1} parent=1 // pred_check_branch
      %103 = sbr.rel (0) target = $region45
    $region44: #{tpu_custom_call.1} parent=1 // pred_region
      %104 = dma.done [#allocation10], 2048
    $region45: #{tpu_custom_call.1} parent=1 // pred_fallthru
      _
    // Predicated region
    $region46: #{tpu_custom_call.1} parent=1 // pred_check
      _
    $region47: #{tpu_custom_call.1} parent=1 // pred_check_branch
      %106 = sbr.rel (0) target = $region49
    $region48: #{tpu_custom_call.1} parent=1 // pred_region
      %107 = dma.done [#allocation10], 16
    $region49: #{tpu_custom_call.1} parent=1 // pred_fallthru
      _
    // Predicated region
    $region50: #{tpu_custom_call.1} parent=1 // pred_check
      _
    $region51: #{tpu_custom_call.1} parent=1 // pred_check_branch
      %109 = sbr.rel (0) target = $region53
    $region52: #{tpu_custom_call.1} parent=1 // pred_region
      %110 = dma.done [#allocation13], 16
    $region53: #{tpu_custom_call.1} parent=1 // pred_fallthru
      _
    // Predicated region
    $region54: #{tpu_custom_call.1} parent=1 // pred_check
      _
    $region55: #{tpu_custom_call.1} parent=1 // pred_check_branch
      %112 = sbr.rel (0) target = $region57
    $region56: #{tpu_custom_call.1} parent=1 // pred_region
      %113 = dma.done [#allocation13], 16
    $region57: #{tpu_custom_call.1} parent=1 // pred_fallthru
      _
    %p114 = scmp.eq.s32.totalorder 0, 0
    // Predicated region
    $region58: #{tpu_custom_call.1} parent=1 // pred_check
      %p115 = pneg %p114
    $region59: #{tpu_custom_call.1} parent=1 // pred_check_branch
      %117 = sbr.rel (%p115) target = $region61
    $region60: #{tpu_custom_call.1} parent=1 // pred_region
      %v118 = vld [vmem:[#allocation11] sm:$0x1]
      %v120 = vlaneseq
      %v121 = vshrl.u32 %v120, 7
      %v122 = vsub.s32 0, %v121
      %v123 = vrot.slane %v118, %v122
      %vm125 = vcmask 261120
      %126 = vst.msk [vmem:[#allocation2] sm:$0xff] %vm125, %v123
      %127 = vst.msk [vmem:[#allocation2 + $0x8] sm:$0xff] %vm125, %v123
    $region61: #{tpu_custom_call.1} parent=1 // pred_fallthru
      _
    %v128 = vld [vmem:[#allocation3] sm:$0xff]
    %v129 = vld [vmem:[#allocation3 + $0x8] sm:$0xff]
    %v130 = vld [vmem:[#allocation6] sm:$0xff]
    %v131 = vld [vmem:[#allocation6 + $0x8] sm:$0xff]
    %v132 = vld [vmem:[#allocation6 + $0x10] sm:$0xff]
    %v133 = vld [vmem:[#allocation6 + $0x18] sm:$0xff]
    %v134 = vld [vmem:[#allocation8] sm:$0x1]
    %v136 = vlaneseq
    %v137 = vshrl.u32 %v136, 7
    %v138 = vsub.s32 0, %v137
    %v139 = vrot.slane %v134, %v138
    %vm141 = vcmask 261120
    %v143 = vsel %vm141, %v128, 0
    %v146 = vsel %vm141, %v129, 0
    %148 = vmatprep.subr.mxu0 0.0
    %149 = vmatpush1.msra.mxu0 %v130
    %150 = vmatprep.subr.mxu0 0.0
    %151 = vmatpush1.msra.mxu0 %v131
    %152 = vmatprep.subr.mxu0 0.0
    %153 = vmatpush1.msra.mxu0 %v132
    %154 = vmatprep.subr.mxu0 0.0
    %155 = vmatpush1.msra.mxu0 %v133
    %156 = vmatprep.subr.mxu0 0.0
    %157 = vmatpush1.msra.mxu0 0.0
    %158 = vmatprep.subr.mxu0 0.0
    %159 = vmatpush1.msra.mxu0 0.0
    %160 = vmatprep.subr.mxu0 0.0
    %161 = vmatpush1.msra.mxu0 0.0
    %162 = vmatprep.subr.mxu0 0.0
    %163 = vmatpush1.msra.mxu0 0.0
    %164 = vmatprep.subr.mxu0 0.0
    %165 = vmatpush1.msra.mxu0 0.0
    %166 = vmatprep.subr.mxu0 0.0
    %167 = vmatpush1.msra.mxu0 0.0
    %168 = vmatprep.subr.mxu0 0.0
    %169 = vmatpush1.msra.mxu0 0.0
    %170 = vmatprep.subr.mxu0 0.0
    %171 = vmatpush1.msra.mxu0 0.0
    %172 = vmatprep.subr.mxu0 0.0
    %173 = vmatpush1.msra.mxu0 0.0
    %174 = vmatprep.subr.mxu0 0.0
    %175 = vmatpush1.msra.mxu0 0.0
    %176 = vmatprep.subr.mxu0 0.0
    %177 = vmatpush1.msra.mxu0 0.0
    %178 = vmatprep.subr.mxu0 0.0
    %179 = vmatpush1.msra.mxu0 0.0
    %180 = vmatprep.subr.mxu0 0.0
    %181 = vmatpush1.msra.mxu0 0.0
    %182 = vmatprep.subr.mxu0 0.0
    %183 = vmatpush1.msra.mxu0 0.0
    %184 = vmatprep.subr.mxu0 0.0
    %185 = vmatpush1.msra.mxu0 0.0
    %186 = vmatprep.subr.mxu0 0.0
    %187 = vmatpush1.msra.mxu0 0.0
    %188 = vmatprep.subr.mxu0 0.0
    %189 = vmatpush1.msra.mxu0 0.0
    %190 = vmatprep.subr.mxu0 0.0
    %191 = vmatpush1.msra.mxu0 0.0
    %192 = vmatprep.subr.mxu0 0.0
    %193 = vmatpush1.msra.mxu0 0.0
    %194 = vmatprep.subr.mxu0 0.0
    %195 = vmatpush1.msra.mxu0 0.0
    %196 = vmatprep.subr.mxu0 0.0
    %197 = vmatpush1.msra.mxu0 0.0
    %198 = vmatprep.subr.mxu0 0.0
    %199 = vmatpush1.msra.mxu0 0.0
    %200 = vmatprep.subr.mxu0 0.0
    %201 = vmatpush1.msra.mxu0 0.0
    %202 = vmatprep.subr.mxu0 0.0
    %203 = vmatpush1.msra.mxu0 0.0
    %204 = vmatprep.subr.mxu0 0.0
    %205 = vmatpush1.msra.mxu0 0.0
    %206 = vmatprep.subr.mxu0 0.0
    %207 = vmatpush1.msra.mxu0 0.0
    %208 = vmatprep.subr.mxu0 0.0
    %209 = vmatpush1.msra.mxu0 0.0
    %210 = vmatprep.subr.mxu0 0.0
    %211 = vmatpush1.msra.mxu0 0.0
    %212 = vmatprep.mubr.f32.mxu0 0.0
    %213 = vmatmul.mubr.f32.gmra.mrb[0].mxu0 %v143
    %v214 = vpop.f32.mrb[0].mxu0
    %v215 = vadd.f32 %v139, %v214
    %v216 = vpop.f32.mrb[0].mxu0
    %217 = vmatprep.mubr.f32.mxu0 0.0
    %218 = vmatmul.mubr.f32.gmra.mrb[0].mxu0 %v146
    %v219 = vpop.f32.mrb[0].mxu0
    %v220 = vadd.f32 %v139, %v219
    %v221 = vpop.f32.mrb[0].mxu0
    %222 = vdwg.mxu0
    %v223 = vmax.f32 %v215, 0.0
    %v224 = vmax.f32 %v220, 0.0
    %v225 = vld [vmem:[#allocation2] sm:$0xff]
    %v226 = vld [vmem:[#allocation2 + $0x8] sm:$0xff]
    %v227 = vld [vmem:[#allocation9] sm:$0xff]
    %v228 = vld [vmem:[#allocation9 + $0x8] sm:$0xff]
    %v229 = vld [vmem:[#allocation9 + $0x10] sm:$0xff]
    %v230 = vld [vmem:[#allocation9 + $0x18] sm:$0xff]
    %v231 = vld [vmem:[#allocation9 + $0x20] sm:$0xff]
    %v232 = vld [vmem:[#allocation9 + $0x28] sm:$0xff]
    %v233 = vld [vmem:[#allocation9 + $0x30] sm:$0xff]
    %v234 = vld [vmem:[#allocation9 + $0x38] sm:$0xff]
    %v235 = vld [vmem:[#allocation9 + $0x40] sm:$0xff]
    %v236 = vld [vmem:[#allocation9 + $0x48] sm:$0xff]
    %v237 = vld [vmem:[#allocation9 + $0x50] sm:$0xff]
    %v238 = vld [vmem:[#allocation9 + $0x58] sm:$0xff]
    %v239 = vld [vmem:[#allocation9 + $0x60] sm:$0xff]
    %v240 = vld [vmem:[#allocation9 + $0x68] sm:$0xff]
    %v241 = vld [vmem:[#allocation9 + $0x70] sm:$0xff]
    %v242 = vld [vmem:[#allocation9 + $0x78] sm:$0xff]
    %243 = vmatprep.subr.mxu0 0.0
    %244 = vmatpush1.msra.mxu0 %v227
    %245 = vmatprep.subr.mxu0 0.0
    %246 = vmatpush1.msra.mxu0 %v228
    %247 = vmatprep.subr.mxu0 0.0
    %248 = vmatpush1.msra.mxu0 %v229
    %249 = vmatprep.subr.mxu0 0.0
    %250 = vmatpush1.msra.mxu0 %v230
    %251 = vmatprep.subr.mxu0 0.0
    %252 = vmatpush1.msra.mxu0 %v231
    %253 = vmatprep.subr.mxu0 0.0
    %254 = vmatpush1.msra.mxu0 %v232
    %255 = vmatprep.subr.mxu0 0.0
    %256 = vmatpush1.msra.mxu0 %v233
    %257 = vmatprep.subr.mxu0 0.0
    %258 = vmatpush1.msra.mxu0 %v234
    %259 = vmatprep.subr.mxu0 0.0
    %260 = vmatpush1.msra.mxu0 %v235
    %261 = vmatprep.subr.mxu0 0.0
    %262 = vmatpush1.msra.mxu0 %v236
    %263 = vmatprep.subr.mxu0 0.0
    %264 = vmatpush1.msra.mxu0 %v237
    %265 = vmatprep.subr.mxu0 0.0
    %266 = vmatpush1.msra.mxu0 %v238
    %267 = vmatprep.subr.mxu0 0.0
    %268 = vmatpush1.msra.mxu0 %v239
    %269 = vmatprep.subr.mxu0 0.0
    %270 = vmatpush1.msra.mxu0 %v240
    %271 = vmatprep.subr.mxu0 0.0
    %272 = vmatpush1.msra.mxu0 %v241
    %273 = vmatprep.subr.mxu0 0.0
    %274 = vmatpush1.msra.mxu0 %v242
    %275 = vmatprep.subr.mxu0 0.0
    %276 = vmatpush1.msra.mxu0 0.0
    %277 = vmatprep.subr.mxu0 0.0
    %278 = vmatpush1.msra.mxu0 0.0
    %279 = vmatprep.subr.mxu0 0.0
    %280 = vmatpush1.msra.mxu0 0.0
    %281 = vmatprep.subr.mxu0 0.0
    %282 = vmatpush1.msra.mxu0 0.0
    %283 = vmatprep.subr.mxu0 0.0
    %284 = vmatpush1.msra.mxu0 0.0
    %285 = vmatprep.subr.mxu0 0.0
    %286 = vmatpush1.msra.mxu0 0.0
    %287 = vmatprep.subr.mxu0 0.0
    %288 = vmatpush1.msra.mxu0 0.0
    %289 = vmatprep.subr.mxu0 0.0
    %290 = vmatpush1.msra.mxu0 0.0
    %291 = vmatprep.subr.mxu0 0.0
    %292 = vmatpush1.msra.mxu0 0.0
    %293 = vmatprep.subr.mxu0 0.0
    %294 = vmatpush1.msra.mxu0 0.0
    %295 = vmatprep.subr.mxu0 0.0
    %296 = vmatpush1.msra.mxu0 0.0
    %297 = vmatprep.subr.mxu0 0.0
    %298 = vmatpush1.msra.mxu0 0.0
    %299 = vmatprep.subr.mxu0 0.0
    %300 = vmatpush1.msra.mxu0 0.0
    %301 = vmatprep.subr.mxu0 0.0
    %302 = vmatpush1.msra.mxu0 0.0
    %303 = vmatprep.subr.mxu0 0.0
    %304 = vmatpush1.msra.mxu0 0.0
    %305 = vmatprep.subr.mxu0 0.0
    %306 = vmatpush1.msra.mxu0 0.0
    %307 = vmatprep.mubr.f32.mxu0 0.0
    %308 = vmatmul.mubr.f32.gmra.mrb[0].mxu0 %v223
    %v309 = vpop.f32.mrb[0].mxu0
    %v310 = vadd.f32 0.0, %v309
    %v311 = vpop.f32.mrb[0].mxu0
    %312 = vmatprep.mubr.f32.mxu0 0.0
    %313 = vmatmul.mubr.f32.gmra.mrb[0].mxu0 %v224
    %v314 = vpop.f32.mrb[0].mxu0
    %v315 = vadd.f32 0.0, %v314
    %v316 = vpop.f32.mrb[0].mxu0
    %317 = vdwg.mxu0
    %v318 = vadd.f32 %v225, %v310
    %v319 = vadd.f32 %v226, %v315
    %320 = vst.msk [vmem:[#allocation2] sm:$0xff] %vm141, %v318
    %321 = vst.msk [vmem:[#allocation2 + $0x8] sm:$0xff] %vm141, %v319
    // Predicated region
    $region62: #{tpu_custom_call.1} parent=1 // pred_check
      %p322 = pneg %p114
    $region63: #{tpu_custom_call.1} parent=1 // pred_check_branch
      %324 = sbr.rel (%p322) target = $region65
    $region64: #{tpu_custom_call.1} parent=1 // pred_region
      %v325 = vld [vmem:[#allocation2] sm:$0xff]
      %v326 = vld [vmem:[#allocation2 + $0x8] sm:$0xff]
      %v327 = vadd.f32 %v325, %v128
      %v328 = vadd.f32 %v326, %v129
      %v329 = vsel %vm141, %v327, 0.0
      %330 = vadd.xlane.f32.xlu0 %v329
      %v331 = vpop.xlane.xlu0 %330
      %v332 = vsel %vm141, %v328, 0.0
      %333 = vadd.xlane.f32.xlu0 %v332
      %v334 = vpop.xlane.xlu0 %333
      %v335 = vrcp.pop 32.0
      %v336 = vmul.f32 %v331, %v335
      %v337 = vmul.f32 %v334, %v335
      %v338 = vsub.f32 %v327, %v336
      %v339 = vsub.f32 %v328, %v337
      %v340 = vmul.f32 %v338, %v338
      %v341 = vmul.f32 %v339, %v339
      %v342 = vsel %vm141, %v340, 0.0
      %343 = vadd.xlane.f32.xlu0 %v342
      %v344 = vpop.xlane.xlu0 %343
      %v345 = vsel %vm141, %v341, 0.0
      %346 = vadd.xlane.f32.xlu0 %v345
      %v347 = vpop.xlane.xlu0 %346
      %v348 = vmul.f32 %v344, %v335
      %v349 = vmul.f32 %v347, %v335
      %v350 = vadd.f32 %v348, 1e-05
      %v351 = vadd.f32 %v349, 1e-05
      %v352 = vrsqrt.pop %v350
      %v353 = vrsqrt.pop %v351
      %v354 = vmul.f32 %v338, %v352
      %v355 = vmul.f32 %v339, %v353
      %v356 = vld [vmem:[#allocation12] sm:$0x1]
      %v358 = vlaneseq
      %v359 = vshrl.u32 %v358, 7
      %v360 = vsub.s32 0, %v359
      %v361 = vrot.slane %v356, %v360
      %v363 = vmul.f32 %v354, %v361
      %v364 = vmul.f32 %v355, %v361
      %v365 = vld [vmem:[#allocation14] sm:$0x1]
      %v367 = vlaneseq
      %v368 = vshrl.u32 %v367, 7
      %v369 = vsub.s32 0, %v368
      %v370 = vrot.slane %v365, %v369
      %v372 = vadd.f32 %v363, %v370
      %v373 = vadd.f32 %v364, %v370
      %374 = vst.msk [vmem:[#allocation15] sm:$0xff] %vm141, %v372
      %375 = vst.msk [vmem:[#allocation15 + $0x8] sm:$0xff] %vm141, %v373
    $region65: #{tpu_custom_call.1} parent=1 // pred_fallthru
      _
    // Predicated region
    $region66: #{tpu_custom_call.1} parent=1 // pred_check
      _
    $region67: #{tpu_custom_call.1} parent=1 // pred_check_branch
      %377 = sbr.rel (0) target = $region69
    $region68: #{tpu_custom_call.1} parent=1 // pred_region
      %s379 = ssub.s32 256, 256
      %380 = vsyncadd [#allocation5], %s379
      %s381 = sshll.u32 [#allocation15], 4
      %s382 = int_to_ptr.vmem [resolvable:$true] %s381
      %387 = dma.vmem_to_hbm [thread:$0]  %s382, 256, %s7, [#allocation5], 128, 128, 8
    $region69: #{tpu_custom_call.1} parent=1 // pred_fallthru
      _
    // Predicated region
    $region70: #{tpu_custom_call.1} parent=1 // pred_check
      _
    $region71: #{tpu_custom_call.1} parent=1 // pred_check_branch
      %389 = sbr.rel (0) target = $region73
    $region72: #{tpu_custom_call.1} parent=1 // pred_region
      %390 = dma.done [#allocation5], 256
    $region73: #{tpu_custom_call.1} parent=1 // pred_fallthru
      _
    %391 = vsyncpa [#allocation4], 1
    %392 = vsyncpa [#allocation7], 1
    %393 = vsyncpa [#allocation10], 1
    %394 = vsyncpa [#allocation13], 1
    %395 = vsyncpa [#allocation5], 1

</llo_original>
